<compile_context>
chip_gen: v6e
topology: v6e:2x2x1
jax: 0.10.0
libtpu: 0.0.40
codegen_flags: <defaults>
</compile_context>

<pallas_src>
import functools

import jax
import jax.numpy as jnp
from jax.experimental import pallas as pl
from jax.experimental.pallas import tpu as pltpu


def _round_up(x, m):
    return (x + m - 1) // m * m


def icnn_kernel(xcol_ref, el_ref, wc_ref, bc_ref, w1a_ref, w1b_ref, b1_ref,
                w2_ref, b2_ref, o_ref, *, bt, lout, lout_pad):
    # xcol_ref: (BT*Lout_pad, K*4)   im2col rows for this batch tile
    # el_ref  : (BT, E)              elements for this batch tile
    # wc_ref  : (K*4, C)             conv weight (im2col layout)
    # bc_ref  : (1, C)               conv bias
    # w1a_ref : (E, Hp)  w1b_ref: (C, Hp)  b1_ref: (1, Hp)
    # w2_ref  : (Hp, NCp)            b2_ref: (1, NCp)
    # o_ref   : (BT, NCp)
    c = wc_ref.shape[1]

    # --- Conv1d as one im2col matmul over the whole batch tile ---
    conv = jnp.dot(xcol_ref[...], wc_ref[...],
                   preferred_element_type=jnp.float32)        # (BT*Lp, C)
    conv3 = conv.reshape(bt, lout_pad, c)                     # free: Lp % 8 == 0

    # Mask padded time steps before the max (padded rows would read as 0).
    if lout_pad != lout:
        t_idx = jax.lax.broadcasted_iota(jnp.int32, (bt, lout_pad, c), 1)
        conv3 = jnp.where(t_idx < lout, conv3, jnp.float32(-3.0e38))

    # --- ReLU + global MaxPool, with bias+relu commuted past the max (exact) ---
    pooled = jnp.max(conv3, axis=1)                           # (BT, C)
    pooled = jnp.maximum(pooled + bc_ref[...], 0.0)

    # --- hidden = ReLU(concat([elements, pooled]) @ W1^T + b1), concat folded ---
    h = (jnp.dot(el_ref[...], w1a_ref[...], preferred_element_type=jnp.float32)
         + jnp.dot(pooled, w1b_ref[...], preferred_element_type=jnp.float32)
         + b1_ref[...])
    h = jnp.maximum(h, 0.0)                                   # (BT, Hp)

    # --- out = hidden @ W2^T + b2 (lane-dense NCp columns) ---
    o_ref[...] = (jnp.dot(h, w2_ref[...], preferred_element_type=jnp.float32)
                  + b2_ref[...])


def icnn_forward_pallas(non_elements_ncw, elements, params, *, batch_tile=None):
    """non_elements_ncw: (B, 4, L) float32 (PyTorch NCW), elements: (B, E)."""
    Wc, bc, W1, b1, W2, b2 = (params["Wc"], params["bc"], params["W1"],
                              params["b1"], params["W2"], params["b2"])
    B, Cin, L = non_elements_ncw.shape
    C, _, K = Wc.shape                     # (num_channels, 4, conv_kernel)
    H, EC = W1.shape                       # (num_hidden, E + C)
    NC = W2.shape[0]
    E = elements.shape[1]
    assert EC == E + C and Cin == 4

    Lout = L - K + 1
    Lp = _round_up(Lout, 8)                # pad time so in-kernel reshape is layout-free
    K4 = K * Cin
    Hp = _round_up(H, 128)                 # lane-dense hidden width
    NCp = _round_up(NC, 128)               # lane-dense output width

    # Batch tile: multiple of 8, capped so the per-step working set stays small.
    bytes_per_row = 4 * (Lp * (K4 + C) + E + Hp + NCp)
    bt_cap = max(8, ((8 * 1024 * 1024) // bytes_per_row) // 8 * 8)
    if batch_tile is None:
        batch_tile = min(512, bt_cap, _round_up(B, 8))
    BT = max(8, _round_up(batch_tile, 8))
    B_pad = _round_up(B, BT)

    # --- Wrapper glue: layout transforms only (no compute hoisted out of kernel) ---
    x_nwc = jnp.transpose(non_elements_ncw, (0, 2, 1))            # (B, L, 4)
    x_nwc = jnp.pad(x_nwc, ((0, B_pad - B), (0, 0), (0, 0)))
    # im2col: row (b, t) = [x[b, t+0, :], ..., x[b, t+K-1, :]]
    xcol = jnp.concatenate([x_nwc[:, k:k + Lout, :] for k in range(K)], axis=-1)
    xcol = jnp.pad(xcol, ((0, 0), (0, Lp - Lout), (0, 0)))        # (B_pad, Lp, K*4)
    xcol_flat = xcol.reshape(B_pad * Lp, K4)

    el_pad = jnp.pad(elements, ((0, B_pad - B), (0, 0)))          # (B_pad, E)

    wc2 = jnp.transpose(Wc, (2, 1, 0)).reshape(K4, C)             # matches im2col order
    bc2 = bc.reshape(1, C)
    W1p = jnp.pad(W1, ((0, Hp - H), (0, 0)))                      # zero hidden rows
    w1a = jnp.transpose(W1p[:, :E])                               # (E, Hp)
    w1b = jnp.transpose(W1p[:, E:])                               # (C, Hp)
    b1p = jnp.pad(b1, (0, Hp - H)).reshape(1, Hp)
    W2p = jnp.pad(W2, ((0, NCp - NC), (0, Hp - H)))               # zero rows/cols
    w2t = jnp.transpose(W2p)                                      # (Hp, NCp)
    b2p = jnp.pad(b2, (0, NCp - NC)).reshape(1, NCp)

    kernel = functools.partial(icnn_kernel, bt=BT, lout=Lout, lout_pad=Lp)

    out_pad = pl.pallas_call(
        kernel,
        out_shape=jax.ShapeDtypeStruct((B_pad, NCp), jnp.float32),
        grid=(B_pad // BT,),
        in_specs=[
            pl.BlockSpec((BT * Lp, K4), lambda b: (b, 0)),        # im2col rows
            pl.BlockSpec((BT, E), lambda b: (b, 0)),              # elements
            pl.BlockSpec((K4, C), lambda b: (0, 0)),              # conv weight (resident)
            pl.BlockSpec((1, C), lambda b: (0, 0)),               # conv bias
            pl.BlockSpec((E, Hp), lambda b: (0, 0)),              # W1 (elements part)
            pl.BlockSpec((C, Hp), lambda b: (0, 0)),              # W1 (pooled part)
            pl.BlockSpec((1, Hp), lambda b: (0, 0)),              # b1
            pl.BlockSpec((Hp, NCp), lambda b: (0, 0)),            # W2
            pl.BlockSpec((1, NCp), lambda b: (0, 0)),             # b2
        ],
        out_specs=pl.BlockSpec((BT, NCp), lambda b: (b, 0)),
        compiler_params=pltpu.CompilerParams(
            dimension_semantics=("parallel",)),
    )(xcol_flat, el_pad, wc2, bc2, w1a, w1b, b1p, w2t, b2p)

    out = out_pad[:B, :NC]
    if NC == 1:                                   # torch .squeeze(dim=-1)
        out = out.reshape(B)
    return out


def icnn_forward_ref(non_elements_ncw, elements, params):
    """Pure-JAX reference matching the PyTorch module exactly."""
    Wc, bc, W1, b1, W2, b2 = (params["Wc"], params["bc"], params["W1"],
                              params["b1"], params["W2"], params["b2"])
    conv = jax.lax.conv_general_dilated(
        non_elements_ncw, Wc, window_strides=(1,), padding="VALID",
        dimension_numbers=("NCW", "OIW", "NCW")) + bc[None, :, None]
    pooled = jnp.max(jnp.maximum(conv, 0.0), axis=-1)           # global max pool
    features = jnp.concatenate([elements, pooled], axis=1)
    hidden = jnp.maximum(features @ W1.T + b1, 0.0)
    out = hidden @ W2.T + b2
    if out.shape[-1] == 1:
        out = out.reshape(out.shape[0])
    return out


def init_params(key, num_classes, elements_length, num_channels, num_hidden,
                conv_kernel):
    """Deterministic PyTorch-style uniform init (synthetic weights)."""
    ks = jax.random.split(key, 6)
    def u(k, shape, fan_in):
        bound = 1.0 / jnp.sqrt(float(fan_in))
        return jax.random.uniform(k, shape, jnp.float32, -bound, bound)
    E, C, H, NC, K = elements_length, num_channels, num_hidden, num_classes, conv_kernel
    return {
        "Wc": u(ks[0], (C, 4, K), 4 * K),
        "bc": u(ks[1], (C,), 4 * K),
        "W1": u(ks[2], (H, E + C), E + C),
        "b1": u(ks[3], (H,), E + C),
        "W2": u(ks[4], (NC, H), H),
        "b2": u(ks[5], (NC,), H),
    }


if __name__ == "__main__":
    # Small shapes consistent with the module's forward.
    B = 2
    num_classes = 3
    elements_length = 16
    non_elements_length = 32
    num_channels = 32
    num_hidden = 64
    conv_kernel = 5

    key = jax.random.PRNGKey(0)
    k_ne, k_el, k_p = jax.random.split(key, 3)
    non_elements = jax.random.normal(k_ne, (B, 4, non_elements_length), jnp.float32)
    elements = jax.random.normal(k_el, (B, elements_length), jnp.float32)
    params = init_params(k_p, num_classes, elements_length, num_channels,
                         num_hidden, conv_kernel)

    out = icnn_forward_pallas(non_elements, elements, params)
    out = jax.block_until_ready(out)

    ref = icnn_forward_ref(non_elements, elements, params)
    assert out.shape == ref.shape, (out.shape, ref.shape)
    assert jnp.allclose(out, ref, rtol=1e-4, atol=1e-4), "mismatch vs reference"

    print("KERNEL_OK")
</pallas_src>

<mosaic_0001>
module attributes {stable_mosaic.version = 11 : i64} {
  func.func @icnn_kernel(%arg0: i32, %arg1: memref<256x20xf32, #tpu.memory_space<vmem>>, %arg2: memref<8x16xf32, #tpu.memory_space<vmem>>, %arg3: memref<20x32xf32, #tpu.memory_space<vmem>>, %arg4: memref<1x32xf32, #tpu.memory_space<vmem>>, %arg5: memref<16x128xf32, #tpu.memory_space<vmem>>, %arg6: memref<32x128xf32, #tpu.memory_space<vmem>>, %arg7: memref<1x128xf32, #tpu.memory_space<vmem>>, %arg8: memref<128x128xf32, #tpu.memory_space<vmem>>, %arg9: memref<1x128xf32, #tpu.memory_space<vmem>>, %arg10: memref<8x128xf32, #tpu.memory_space<vmem>>) attributes {dimension_semantics = [#tpu.dimension_semantics<parallel>], iteration_bounds = array<i64: 1>, scalar_prefetch = 0 : i64, scratch_operands = 0 : i64, tpu.core_type = #tpu.core_type<tc>, window_params = [{transform_indices = @transform_0, window_bounds = array<i64: 256, 20>}, {transform_indices = @transform_1, window_bounds = array<i64: 8, 16>}, {pipeline_mode = #tpu.pipeline_mode<synchronous>, transform_indices = @transform_2, window_bounds = array<i64: 20, 32>}, {pipeline_mode = #tpu.pipeline_mode<synchronous>, transform_indices = @transform_3, window_bounds = array<i64: 1, 32>}, {pipeline_mode = #tpu.pipeline_mode<synchronous>, transform_indices = @transform_4, window_bounds = array<i64: 16, 128>}, {pipeline_mode = #tpu.pipeline_mode<synchronous>, transform_indices = @transform_5, window_bounds = array<i64: 32, 128>}, {pipeline_mode = #tpu.pipeline_mode<synchronous>, transform_indices = @transform_6, window_bounds = array<i64: 1, 128>}, {pipeline_mode = #tpu.pipeline_mode<synchronous>, transform_indices = @transform_7, window_bounds = array<i64: 128, 128>}, {pipeline_mode = #tpu.pipeline_mode<synchronous>, transform_indices = @transform_8, window_bounds = array<i64: 1, 128>}, {transform_indices = @transform_9, window_bounds = array<i64: 8, 128>}]} {
    %c0 = arith.constant 0 : index
    %c0_0 = arith.constant 0 : index
    %0 = vector.load %arg1[%c0, %c0_0] : memref<256x20xf32, #tpu.memory_space<vmem>>, vector<256x20xf32>
    %c0_1 = arith.constant 0 : index
    %c0_2 = arith.constant 0 : index
    %1 = vector.load %arg3[%c0_1, %c0_2] : memref<20x32xf32, #tpu.memory_space<vmem>>, vector<20x32xf32>
    %cst = arith.constant dense<0.000000e+00> : vector<256x32xf32>
    %2 = tpu.matmul %0, %1, %cst {dimension_numbers = #tpu.dot_dimension_numbers<[1], [0], [0], [1], [0, 0, 1, 1], [], []>} : vector<256x20xf32>, vector<20x32xf32>, vector<256x32xf32> -> vector<256x32xf32>
    %3 = vector.shape_cast %2 : vector<256x32xf32> to vector<8x32x32xf32>
    %4 = tpu.iota {dimensions = array<i32: 1>} : vector<8x32x32xi32>
    %c28_i32 = arith.constant 28 : i32
    %5 = vector.broadcast %c28_i32 : i32 to vector<8x32x32xi32>
    %6 = arith.cmpi slt, %4, %5 : vector<8x32x32xi32>
    %cst_3 = arith.constant -3.000000e+38 : f32
    %7 = vector.broadcast %cst_3 : f32 to vector<8x32x32xf32>
    %8 = arith.select %6, %3, %7 : vector<8x32x32xi1>, vector<8x32x32xf32>
    %cst_4 = arith.constant dense<0xFF800000> : vector<8x32xf32>
    %9 = vector.multi_reduction <maximumf>, %8, %cst_4 [1] : vector<8x32x32xf32> to vector<8x32xf32>
    %c0_5 = arith.constant 0 : index
    %c0_6 = arith.constant 0 : index
    %10 = vector.load %arg4[%c0_5, %c0_6] : memref<1x32xf32, #tpu.memory_space<vmem>>, vector<1x32xf32>
    %11 = vector.broadcast %10 : vector<1x32xf32> to vector<8x32xf32>
    %12 = arith.addf %9, %11 : vector<8x32xf32>
    %cst_7 = arith.constant 0.000000e+00 : f32
    %13 = vector.broadcast %cst_7 : f32 to vector<8x32xf32>
    %14 = arith.maximumf %12, %13 : vector<8x32xf32>
    %c0_8 = arith.constant 0 : index
    %c0_9 = arith.constant 0 : index
    %15 = vector.load %arg2[%c0_8, %c0_9] : memref<8x16xf32, #tpu.memory_space<vmem>>, vector<8x16xf32>
    %c0_10 = arith.constant 0 : index
    %c0_11 = arith.constant 0 : index
    %16 = vector.load %arg5[%c0_10, %c0_11] : memref<16x128xf32, #tpu.memory_space<vmem>>, vector<16x128xf32>
    %cst_12 = arith.constant dense<0.000000e+00> : vector<8x128xf32>
    %17 = tpu.matmul %15, %16, %cst_12 {dimension_numbers = #tpu.dot_dimension_numbers<[1], [0], [0], [1], [0, 0, 1, 1], [], []>} : vector<8x16xf32>, vector<16x128xf32>, vector<8x128xf32> -> vector<8x128xf32>
    %c0_13 = arith.constant 0 : index
    %c0_14 = arith.constant 0 : index
    %18 = vector.load %arg6[%c0_13, %c0_14] : memref<32x128xf32, #tpu.memory_space<vmem>>, vector<32x128xf32>
    %cst_15 = arith.constant dense<0.000000e+00> : vector<8x128xf32>
    %19 = tpu.matmul %14, %18, %cst_15 {dimension_numbers = #tpu.dot_dimension_numbers<[1], [0], [0], [1], [0, 0, 1, 1], [], []>} : vector<8x32xf32>, vector<32x128xf32>, vector<8x128xf32> -> vector<8x128xf32>
    %20 = arith.addf %17, %19 : vector<8x128xf32>
    %c0_16 = arith.constant 0 : index
    %c0_17 = arith.constant 0 : index
    %21 = vector.load %arg7[%c0_16, %c0_17] : memref<1x128xf32, #tpu.memory_space<vmem>>, vector<1x128xf32>
    %22 = vector.broadcast %21 : vector<1x128xf32> to vector<8x128xf32>
    %23 = arith.addf %20, %22 : vector<8x128xf32>
    %cst_18 = arith.constant 0.000000e+00 : f32
    %24 = vector.broadcast %cst_18 : f32 to vector<8x128xf32>
    %25 = arith.maximumf %23, %24 : vector<8x128xf32>
    %c0_19 = arith.constant 0 : index
    %c0_20 = arith.constant 0 : index
    %26 = vector.load %arg8[%c0_19, %c0_20] : memref<128x128xf32, #tpu.memory_space<vmem>>, vector<128x128xf32>
    %cst_21 = arith.constant dense<0.000000e+00> : vector<8x128xf32>
    %27 = tpu.matmul %25, %26, %cst_21 {dimension_numbers = #tpu.dot_dimension_numbers<[1], [0], [0], [1], [0, 0, 1, 1], [], []>} : vector<8x128xf32>, vector<128x128xf32>, vector<8x128xf32> -> vector<8x128xf32>
    %c0_22 = arith.constant 0 : index
    %c0_23 = arith.constant 0 : index
    %28 = vector.load %arg9[%c0_22, %c0_23] : memref<1x128xf32, #tpu.memory_space<vmem>>, vector<1x128xf32>
    %29 = vector.broadcast %28 : vector<1x128xf32> to vector<8x128xf32>
    %30 = arith.addf %27, %29 : vector<8x128xf32>
    %c0_24 = arith.constant 0 : index
    %c0_25 = arith.constant 0 : index
    %31 = vector.load %arg10[%c0_24, %c0_25] : memref<8x128xf32, #tpu.memory_space<vmem>>, vector<8x128xf32>
    tpu.vector_store %arg10[%c0_24, %c0_25], %30 {strides = array<i32>} : memref<8x128xf32, #tpu.memory_space<vmem>>, vector<8x128xf32>,
    return
  }
  func.func @transform_0(%arg0: i32) -> (i32, i32) {
    %c0_i32 = arith.constant 0 : i32
    %c0_i32_0 = arith.constant 0 : i32
    return %arg0, %c0_i32 : i32, i32
  }
  func.func @transform_1(%arg0: i32) -> (i32, i32) {
    %c0_i32 = arith.constant 0 : i32
    %c0_i32_0 = arith.constant 0 : i32
    return %arg0, %c0_i32 : i32, i32
  }
  func.func @transform_2(%arg0: i32) -> (i32, i32) {
    %c0_i32 = arith.constant 0 : i32
    %c0_i32_0 = arith.constant 0 : i32
    %c0_i32_1 = arith.constant 0 : i32
    return %c0_i32, %c0_i32_0 : i32, i32
  }
  func.func @transform_3(%arg0: i32) -> (i32, i32) {
    %c0_i32 = arith.constant 0 : i32
    %c0_i32_0 = arith.constant 0 : i32
    %c0_i32_1 = arith.constant 0 : i32
    return %c0_i32, %c0_i32_0 : i32, i32
  }
  func.func @transform_4(%arg0: i32) -> (i32, i32) {
    %c0_i32 = arith.constant 0 : i32
    %c0_i32_0 = arith.constant 0 : i32
    %c0_i32_1 = arith.constant 0 : i32
    return %c0_i32, %c0_i32_0 : i32, i32
  }
  func.func @transform_5(%arg0: i32) -> (i32, i32) {
    %c0_i32 = arith.constant 0 : i32
    %c0_i32_0 = arith.constant 0 : i32
    %c0_i32_1 = arith.constant 0 : i32
    return %c0_i32, %c0_i32_0 : i32, i32
  }
  func.func @transform_6(%arg0: i32) -> (i32, i32) {
    %c0_i32 = arith.constant 0 : i32
    %c0_i32_0 = arith.constant 0 : i32
    %c0_i32_1 = arith.constant 0 : i32
    return %c0_i32, %c0_i32_0 : i32, i32
  }
  func.func @transform_7(%arg0: i32) -> (i32, i32) {
    %c0_i32 = arith.constant 0 : i32
    %c0_i32_0 = arith.constant 0 : i32
    %c0_i32_1 = arith.constant 0 : i32
    return %c0_i32, %c0_i32_0 : i32, i32
  }
  func.func @transform_8(%arg0: i32) -> (i32, i32) {
    %c0_i32 = arith.constant 0 : i32
    %c0_i32_0 = arith.constant 0 : i32
    %c0_i32_1 = arith.constant 0 : i32
    return %c0_i32, %c0_i32_0 : i32, i32
  }
  func.func @transform_9(%arg0: i32) -> (i32, i32) {
    %c0_i32 = arith.constant 0 : i32
    %c0_i32_0 = arith.constant 0 : i32
    return %arg0, %c0_i32 : i32, i32
  }
}

</mosaic_0001>

<llo_original>
// kernel: tpu_custom_call.1
$region0: #{tpu_custom_call.1}
  #allocation0 [shape = 'u32[]', space=smem, size = 0x4, offset = 0x4, fixed_abs, tag = 'smem constant byte address 0x4 - core index']
  #allocation1 [shape = 'u32[144,128]{1,0:T(1,128)}', space=vmem, size = 0x12000, scoped, tag = 'internal scratch']
  %s0 = inlined_call_operand.vmem [shape: f32[256,20], index: 0, kind: input, shape index: {}]
  %s1 = inlined_call_operand.vmem [shape: f32[8,16], index: 1, kind: input, shape index: {}]
  %s2 = inlined_call_operand.vmem [shape: f32[20,32], index: 2, kind: input, shape index: {}]
  %s3 = inlined_call_operand.vmem [shape: f32[1,32], index: 3, kind: input, shape index: {}]
  %s4 = inlined_call_operand.vmem [shape: f32[16,128], index: 4, kind: input, shape index: {}]
  %s5 = inlined_call_operand.vmem [shape: f32[32,128], index: 5, kind: input, shape index: {}]
  %s6 = inlined_call_operand.vmem [shape: f32[1,128], index: 6, kind: input, shape index: {}]
  %s7 = inlined_call_operand.vmem [shape: f32[128,128], index: 7, kind: input, shape index: {}]
  %s8 = inlined_call_operand.vmem [shape: f32[1,128], index: 8, kind: input, shape index: {}]
  %s9 = inlined_call_operand.hbm [shape: f32[8,128], index: 9, kind: output, shape index: {}]
  %s10 = sld [smem:[#allocation0]]
  $region46: #{tpu_custom_call.1} parent=0
    _
  %s12 = ssub.s32 1, %s10
  %s13 = scalar_select 0, %s12, %s10
  $region1: #{tpu_custom_call.1} parent=0
    #allocation2 [shape = 'u8[4096]{0}', space=vmem, size = 0x1000, scoped, tag = 'output window, operand 0, single buffered']
    #allocation3 [shape = 's32[1]{0}', space=sflag, size = 0x4, scoped, tag = 'scoped memory for tpu_custom_call.1']
    %14 = vsyncpa [#allocation3], 0
    // Predicated region
    $region2: #{tpu_custom_call.1} parent=1 // pred_check
      _
    $region3: #{tpu_custom_call.1} parent=1 // pred_check_branch
      %16 = sbr.rel (0) target = $region5
    $region4: #{tpu_custom_call.1} parent=1 // pred_region
      _
    $region5: #{tpu_custom_call.1} parent=1 // pred_fallthru
      _
    // Predicated region
    $region6: #{tpu_custom_call.1} parent=1 // pred_check
      _
    $region7: #{tpu_custom_call.1} parent=1 // pred_check_branch
      %18 = sbr.rel (0) target = $region9
    $region8: #{tpu_custom_call.1} parent=1 // pred_region
      _
    $region9: #{tpu_custom_call.1} parent=1 // pred_fallthru
      _
    // Predicated region
    $region10: #{tpu_custom_call.1} parent=1 // pred_check
      _
    $region11: #{tpu_custom_call.1} parent=1 // pred_check_branch
      %20 = sbr.rel (0) target = $region13
    $region12: #{tpu_custom_call.1} parent=1 // pred_region
      _
    $region13: #{tpu_custom_call.1} parent=1 // pred_fallthru
      _
    // Predicated region
    $region14: #{tpu_custom_call.1} parent=1 // pred_check
      _
    $region15: #{tpu_custom_call.1} parent=1 // pred_check_branch
      %22 = sbr.rel (0) target = $region17
    $region16: #{tpu_custom_call.1} parent=1 // pred_region
      _
    $region17: #{tpu_custom_call.1} parent=1 // pred_fallthru
      _
    // Predicated region
    $region18: #{tpu_custom_call.1} parent=1 // pred_check
      _
    $region19: #{tpu_custom_call.1} parent=1 // pred_check_branch
      %24 = sbr.rel (0) target = $region21
    $region20: #{tpu_custom_call.1} parent=1 // pred_region
      _
    $region21: #{tpu_custom_call.1} parent=1 // pred_fallthru
      _
    // Predicated region
    $region22: #{tpu_custom_call.1} parent=1 // pred_check
      _
    $region23: #{tpu_custom_call.1} parent=1 // pred_check_branch
      %26 = sbr.rel (0) target = $region25
    $region24: #{tpu_custom_call.1} parent=1 // pred_region
      _
    $region25: #{tpu_custom_call.1} parent=1 // pred_fallthru
      _
    // Predicated region
    $region26: #{tpu_custom_call.1} parent=1 // pred_check
      _
    $region27: #{tpu_custom_call.1} parent=1 // pred_check_branch
      %28 = sbr.rel (0) target = $region29
    $region28: #{tpu_custom_call.1} parent=1 // pred_region
      _
    $region29: #{tpu_custom_call.1} parent=1 // pred_fallthru
      _
    // Predicated region
    $region30: #{tpu_custom_call.1} parent=1 // pred_check
      _
    $region31: #{tpu_custom_call.1} parent=1 // pred_check_branch
      %30 = sbr.rel (0) target = $region33
    $region32: #{tpu_custom_call.1} parent=1 // pred_region
      _
    $region33: #{tpu_custom_call.1} parent=1 // pred_fallthru
      _
    // Predicated region
    $region34: #{tpu_custom_call.1} parent=1 // pred_check
      _
    $region35: #{tpu_custom_call.1} parent=1 // pred_check_branch
      %32 = sbr.rel (0) target = $region37
    $region36: #{tpu_custom_call.1} parent=1 // pred_region
      _
    $region37: #{tpu_custom_call.1} parent=1 // pred_fallthru
      _
    %v33 = vld [vmem:[%s0] sm:$0xff]
    %v34 = vld [vmem:[%s0 + $0x8] sm:$0xff]
    %v35 = vld [vmem:[%s0 + $0x10] sm:$0xff]
    %v36 = vld [vmem:[%s0 + $0x18] sm:$0xff]
    %v37 = vld [vmem:[%s0 + $0x20] sm:$0xff]
    %v38 = vld [vmem:[%s0 + $0x28] sm:$0xff]
    %v39 = vld [vmem:[%s0 + $0x30] sm:$0xff]
    %v40 = vld [vmem:[%s0 + $0x38] sm:$0xff]
    %v41 = vld [vmem:[%s0 + $0x40] sm:$0xff]
    %v42 = vld [vmem:[%s0 + $0x48] sm:$0xff]
    %v43 = vld [vmem:[%s0 + $0x50] sm:$0xff]
    %v44 = vld [vmem:[%s0 + $0x58] sm:$0xff]
    %v45 = vld [vmem:[%s0 + $0x60] sm:$0xff]
    %v46 = vld [vmem:[%s0 + $0x68] sm:$0xff]
    %v47 = vld [vmem:[%s0 + $0x70] sm:$0xff]
    %v48 = vld [vmem:[%s0 + $0x78] sm:$0xff]
    %v49 = vld [vmem:[%s0 + $0x80] sm:$0xff]
    %v50 = vld [vmem:[%s0 + $0x88] sm:$0xff]
    %v51 = vld [vmem:[%s0 + $0x90] sm:$0xff]
    %v52 = vld [vmem:[%s0 + $0x98] sm:$0xff]
    %v53 = vld [vmem:[%s0 + $0xa0] sm:$0xff]
    %v54 = vld [vmem:[%s0 + $0xa8] sm:$0xff]
    %v55 = vld [vmem:[%s0 + $0xb0] sm:$0xff]
    %v56 = vld [vmem:[%s0 + $0xb8] sm:$0xff]
    %v57 = vld [vmem:[%s0 + $0xc0] sm:$0xff]
    %v58 = vld [vmem:[%s0 + $0xc8] sm:$0xff]
    %v59 = vld [vmem:[%s0 + $0xd0] sm:$0xff]
    %v60 = vld [vmem:[%s0 + $0xd8] sm:$0xff]
    %v61 = vld [vmem:[%s0 + $0xe0] sm:$0xff]
    %v62 = vld [vmem:[%s0 + $0xe8] sm:$0xff]
    %v63 = vld [vmem:[%s0 + $0xf0] sm:$0xff]
    %v64 = vld [vmem:[%s0 + $0xf8] sm:$0xff]
    %v65 = vld [vmem:[%s2] sm:$0xff]
    %v66 = vld [vmem:[%s2 + $0x8] sm:$0xff]
    %v67 = vld [vmem:[%s2 + $0x10] sm:$0xf]
    %vm68 = vcmask 162816
    %v70 = vsel %vm68, %v33, 0
    %v73 = vsel %vm68, %v34, 0
    %v76 = vsel %vm68, %v35, 0
    %v79 = vsel %vm68, %v36, 0
    %v82 = vsel %vm68, %v37, 0
    %v85 = vsel %vm68, %v38, 0
    %v88 = vsel %vm68, %v39, 0
    %v91 = vsel %vm68, %v40, 0
    %v94 = vsel %vm68, %v41, 0
    %v97 = vsel %vm68, %v42, 0
    %v100 = vsel %vm68, %v43, 0
    %v103 = vsel %vm68, %v44, 0
    %v106 = vsel %vm68, %v45, 0
    %v109 = vsel %vm68, %v46, 0
    %v112 = vsel %vm68, %v47, 0
    %v115 = vsel %vm68, %v48, 0
    %v118 = vsel %vm68, %v49, 0
    %v121 = vsel %vm68, %v50, 0
    %v124 = vsel %vm68, %v51, 0
    %v127 = vsel %vm68, %v52, 0
    %v130 = vsel %vm68, %v53, 0
    %v133 = vsel %vm68, %v54, 0
    %v136 = vsel %vm68, %v55, 0
    %v139 = vsel %vm68, %v56, 0
    %v142 = vsel %vm68, %v57, 0
    %v145 = vsel %vm68, %v58, 0
    %v148 = vsel %vm68, %v59, 0
    %v151 = vsel %vm68, %v60, 0
    %v154 = vsel %vm68, %v61, 0
    %v157 = vsel %vm68, %v62, 0
    %v160 = vsel %vm68, %v63, 0
    %v163 = vsel %vm68, %v64, 0
    %vm165 = vcmask 1043456
    %v167 = vsel %vm165, %v67, 0
    %169 = vmatprep.subr.mxu0 0.0
    %170 = vmatpush1.msra.mxu0 0.0
    %171 = vmatprep.subr.mxu0 0.0
    %172 = vmatpush1.msra.mxu0 0.0
    %173 = vmatprep.subr.mxu0 0.0
    %174 = vmatpush1.msra.mxu0 0.0
    %175 = vmatprep.subr.mxu0 0.0
    %176 = vmatpush1.msra.mxu0 0.0
    %177 = vmatprep.subr.mxu0 0.0
    %178 = vmatpush1.msra.mxu0 0.0
    %179 = vmatprep.subr.mxu0 0.0
    %180 = vmatpush1.msra.mxu0 0.0
    %181 = vmatprep.subr.mxu0 0.0
    %182 = vmatpush1.msra.mxu0 0.0
    %183 = vmatprep.subr.mxu0 0.0
    %184 = vmatpush1.msra.mxu0 0.0
    %185 = vmatprep.subr.mxu0 0.0
    %186 = vmatpush1.msra.mxu0 0.0
    %187 = vmatprep.subr.mxu0 0.0
    %188 = vmatpush1.msra.mxu0 0.0
    %189 = vmatprep.subr.mxu0 0.0
    %190 = vmatpush1.msra.mxu0 0.0
    %191 = vmatprep.subr.mxu0 0.0
    %192 = vmatpush1.msra.mxu0 0.0
    %193 = vmatprep.subr.mxu0 0.0
    %194 = vmatpush1.msra.mxu0 0.0
    %195 = vmatprep.subr.mxu0 0.0
    %196 = vmatpush1.msra.mxu0 %v167
    %197 = vmatprep.subr.mxu0 0.0
    %198 = vmatpush1.msra.mxu0 %v66
    %199 = vmatprep.subr.mxu0 0.0
    %200 = vmatpush1.msra.mxu0 %v65
    %201 = vmatprep.subr.mxu0 0.0
    %202 = vmatpush2.msra.mxu0 0.0
    %203 = vmatprep.subr.mxu0 0.0
    %204 = vmatpush2.msra.mxu0 0.0
    %205 = vmatprep.subr.mxu0 0.0
    %206 = vmatpush2.msra.mxu0 0.0
    %207 = vmatprep.subr.mxu0 0.0
    %208 = vmatpush2.msra.mxu0 0.0
    %209 = vmatprep.subr.mxu0 0.0
    %210 = vmatpush2.msra.mxu0 0.0
    %211 = vmatprep.subr.mxu0 0.0
    %212 = vmatpush2.msra.mxu0 0.0
    %213 = vmatprep.subr.mxu0 0.0
    %214 = vmatpush2.msra.mxu0 0.0
    %215 = vmatprep.subr.mxu0 0.0
    %216 = vmatpush2.msra.mxu0 0.0
    %217 = vmatprep.subr.mxu0 0.0
    %218 = vmatpush2.msra.mxu0 0.0
    %219 = vmatprep.subr.mxu0 0.0
    %220 = vmatpush2.msra.mxu0 0.0
    %221 = vmatprep.subr.mxu0 0.0
    %222 = vmatpush2.msra.mxu0 0.0
    %223 = vmatprep.subr.mxu0 0.0
    %224 = vmatpush2.msra.mxu0 0.0
    %225 = vmatprep.subr.mxu0 0.0
    %226 = vmatpush2.msra.mxu0 0.0
    %227 = vmatprep.subr.mxu0 0.0
    %228 = vmatpush2.msra.mxu0 0.0
    %229 = vmatprep.subr.mxu0 0.0
    %230 = vmatpush2.msra.mxu0 0.0
    %231 = vmatprep.subr.mxu0 0.0
    %232 = vmatpush2.msra.mxu0 0.0
    %233 = vmatprep.mubr.f32.mxu0 0.0
    %234 = vmatmul.mubr.f32.gmra.mxu0 %v70
    %v235 = vpop.f32.mrf.mxu0
    %v236 = vadd.f32 0.0, %v235
    %v237 = vpop.f32.mrf.mxu0
    %238 = vmatprep.mubr.f32.mxu0 0.0
    %239 = vmatmul.mubr.f32.gmra.mxu0 %v73
    %v240 = vpop.f32.mrf.mxu0
    %v241 = vadd.f32 0.0, %v240
    %v242 = vpop.f32.mrf.mxu0
    %243 = vmatprep.mubr.f32.mxu0 0.0
    %244 = vmatmul.mubr.f32.gmra.mxu0 %v76
    %v245 = vpop.f32.mrf.mxu0
    %v246 = vadd.f32 0.0, %v245
    %v247 = vpop.f32.mrf.mxu0
    %248 = vmatprep.mubr.f32.mxu0 0.0
    %249 = vmatmul.mubr.f32.gmra.mxu0 %v79
    %v250 = vpop.f32.mrf.mxu0
    %v251 = vadd.f32 0.0, %v250
    %v252 = vpop.f32.mrf.mxu0
    %253 = vmatprep.mubr.f32.mxu0 0.0
    %254 = vmatmul.mubr.f32.gmra.mxu0 %v82
    %v255 = vpop.f32.mrf.mxu0
    %v256 = vadd.f32 0.0, %v255
    %v257 = vpop.f32.mrf.mxu0
    %258 = vmatprep.mubr.f32.mxu0 0.0
    %259 = vmatmul.mubr.f32.gmra.mxu0 %v85
    %v260 = vpop.f32.mrf.mxu0
    %v261 = vadd.f32 0.0, %v260
    %v262 = vpop.f32.mrf.mxu0
    %263 = vmatprep.mubr.f32.mxu0 0.0
    %264 = vmatmul.mubr.f32.gmra.mxu0 %v88
    %v265 = vpop.f32.mrf.mxu0
    %v266 = vadd.f32 0.0, %v265
    %v267 = vpop.f32.mrf.mxu0
    %268 = vmatprep.mubr.f32.mxu0 0.0
    %269 = vmatmul.mubr.f32.gmra.mxu0 %v91
    %v270 = vpop.f32.mrf.mxu0
    %v271 = vadd.f32 0.0, %v270
    %v272 = vpop.f32.mrf.mxu0
    %273 = vmatprep.mubr.f32.mxu0 0.0
    %274 = vmatmul.mubr.f32.gmra.mxu0 %v94
    %v275 = vpop.f32.mrf.mxu0
    %v276 = vadd.f32 0.0, %v275
    %v277 = vpop.f32.mrf.mxu0
    %278 = vmatprep.mubr.f32.mxu0 0.0
    %279 = vmatmul.mubr.f32.gmra.mxu0 %v97
    %v280 = vpop.f32.mrf.mxu0
    %v281 = vadd.f32 0.0, %v280
    %v282 = vpop.f32.mrf.mxu0
    %283 = vmatprep.mubr.f32.mxu0 0.0
    %284 = vmatmul.mubr.f32.gmra.mxu0 %v100
    %v285 = vpop.f32.mrf.mxu0
    %v286 = vadd.f32 0.0, %v285
    %v287 = vpop.f32.mrf.mxu0
    %288 = vmatprep.mubr.f32.mxu0 0.0
    %289 = vmatmul.mubr.f32.gmra.mxu0 %v103
    %v290 = vpop.f32.mrf.mxu0
    %v291 = vadd.f32 0.0, %v290
    %v292 = vpop.f32.mrf.mxu0
    %293 = vmatprep.mubr.f32.mxu0 0.0
    %294 = vmatmul.mubr.f32.gmra.mxu0 %v106
    %v295 = vpop.f32.mrf.mxu0
    %v296 = vadd.f32 0.0, %v295
    %v297 = vpop.f32.mrf.mxu0
    %298 = vmatprep.mubr.f32.mxu0 0.0
    %299 = vmatmul.mubr.f32.gmra.mxu0 %v109
    %v300 = vpop.f32.mrf.mxu0
    %v301 = vadd.f32 0.0, %v300
    %v302 = vpop.f32.mrf.mxu0
    %303 = vmatprep.mubr.f32.mxu0 0.0
    %304 = vmatmul.mubr.f32.gmra.mxu0 %v112
    %v305 = vpop.f32.mrf.mxu0
    %v306 = vadd.f32 0.0, %v305
    %v307 = vpop.f32.mrf.mxu0
    %308 = vmatprep.mubr.f32.mxu0 0.0
    %309 = vmatmul.mubr.f32.gmra.mxu0 %v115
    %v310 = vpop.f32.mrf.mxu0
    %v311 = vadd.f32 0.0, %v310
    %v312 = vpop.f32.mrf.mxu0
    %313 = vmatprep.mubr.f32.mxu0 0.0
    %314 = vmatmul.mubr.f32.gmra.mxu0 %v118
    %v315 = vpop.f32.mrf.mxu0
    %v316 = vadd.f32 0.0, %v315
    %v317 = vpop.f32.mrf.mxu0
    %318 = vmatprep.mubr.f32.mxu0 0.0
    %319 = vmatmul.mubr.f32.gmra.mxu0 %v121
    %v320 = vpop.f32.mrf.mxu0
    %v321 = vadd.f32 0.0, %v320
    %v322 = vpop.f32.mrf.mxu0
    %323 = vmatprep.mubr.f32.mxu0 0.0
    %324 = vmatmul.mubr.f32.gmra.mxu0 %v124
    %v325 = vpop.f32.mrf.mxu0
    %v326 = vadd.f32 0.0, %v325
    %v327 = vpop.f32.mrf.mxu0
    %328 = vmatprep.mubr.f32.mxu0 0.0
    %329 = vmatmul.mubr.f32.gmra.mxu0 %v127
    %v330 = vpop.f32.mrf.mxu0
    %v331 = vadd.f32 0.0, %v330
    %v332 = vpop.f32.mrf.mxu0
    %333 = vmatprep.mubr.f32.mxu0 0.0
    %334 = vmatmul.mubr.f32.gmra.mxu0 %v130
    %v335 = vpop.f32.mrf.mxu0
    %v336 = vadd.f32 0.0, %v335
    %v337 = vpop.f32.mrf.mxu0
    %338 = vmatprep.mubr.f32.mxu0 0.0
    %339 = vmatmul.mubr.f32.gmra.mxu0 %v133
    %v340 = vpop.f32.mrf.mxu0
    %v341 = vadd.f32 0.0, %v340
    %v342 = vpop.f32.mrf.mxu0
    %343 = vmatprep.mubr.f32.mxu0 0.0
    %344 = vmatmul.mubr.f32.gmra.mxu0 %v136
    %v345 = vpop.f32.mrf.mxu0
    %v346 = vadd.f32 0.0, %v345
    %v347 = vpop.f32.mrf.mxu0
    %348 = vmatprep.mubr.f32.mxu0 0.0
    %349 = vmatmul.mubr.f32.gmra.mxu0 %v139
    %v350 = vpop.f32.mrf.mxu0
    %v351 = vadd.f32 0.0, %v350
    %v352 = vpop.f32.mrf.mxu0
    %353 = vmatprep.mubr.f32.mxu0 0.0
    %354 = vmatmul.mubr.f32.gmra.mxu0 %v142
    %v355 = vpop.f32.mrf.mxu0
    %v356 = vadd.f32 0.0, %v355
    %v357 = vpop.f32.mrf.mxu0
    %358 = vmatprep.mubr.f32.mxu0 0.0
    %359 = vmatmul.mubr.f32.gmra.mxu0 %v145
    %v360 = vpop.f32.mrf.mxu0
    %v361 = vadd.f32 0.0, %v360
    %v362 = vpop.f32.mrf.mxu0
    %363 = vmatprep.mubr.f32.mxu0 0.0
    %364 = vmatmul.mubr.f32.gmra.mxu0 %v148
    %v365 = vpop.f32.mrf.mxu0
    %v366 = vadd.f32 0.0, %v365
    %v367 = vpop.f32.mrf.mxu0
    %368 = vmatprep.mubr.f32.mxu0 0.0
    %369 = vmatmul.mubr.f32.gmra.mxu0 %v151
    %v370 = vpop.f32.mrf.mxu0
    %v371 = vadd.f32 0.0, %v370
    %v372 = vpop.f32.mrf.mxu0
    %373 = vmatprep.mubr.f32.mxu0 0.0
    %374 = vmatmul.mubr.f32.gmra.mxu0 %v154
    %v375 = vpop.f32.mrf.mxu0
    %v376 = vadd.f32 0.0, %v375
    %v377 = vpop.f32.mrf.mxu0
    %378 = vmatprep.mubr.f32.mxu0 0.0
    %379 = vmatmul.mubr.f32.gmra.mxu0 %v157
    %v380 = vpop.f32.mrf.mxu0
    %v381 = vadd.f32 0.0, %v380
    %v382 = vpop.f32.mrf.mxu0
    %383 = vmatprep.mubr.f32.mxu0 0.0
    %384 = vmatmul.mubr.f32.gmra.mxu0 %v160
    %v385 = vpop.f32.mrf.mxu0
    %v386 = vadd.f32 0.0, %v385
    %v387 = vpop.f32.mrf.mxu0
    %388 = vmatprep.mubr.f32.mxu0 0.0
    %389 = vmatmul.mubr.f32.gmra.mxu0 %v163
    %v390 = vpop.f32.mrf.mxu0
    %v391 = vadd.f32 0.0, %v390
    %v392 = vpop.f32.mrf.mxu0
    %393 = vdwg.mxu0
    %v394 = vlaneseq
    %v395 = vshrl.u32 %v394, 7
    %v396 = vadd.s32 %v395, 8
    %v397 = vadd.s32 %v395, 16
    %v398 = vadd.s32 %v395, 24
    %vm399 = vcmp.lt.s32.totalorder %v395, 28
    %vm400 = vcmp.lt.s32.totalorder %v396, 28
    %vm401 = vcmp.lt.s32.totalorder %v397, 28
    %vm402 = vcmp.lt.s32.totalorder %v398, 28
    %v403 = vsel %vm399, %v236, -3e+38
    %v404 = vsel %vm400, %v241, -3e+38
    %v405 = vsel %vm401, %v246, -3e+38
    %v406 = vsel %vm402, %v251, -3e+38
    %v407 = vsel %vm399, %v256, -3e+38
    %v408 = vsel %vm400, %v261, -3e+38
    %v409 = vsel %vm401, %v266, -3e+38
    %v410 = vsel %vm402, %v271, -3e+38
    %v411 = vsel %vm399, %v276, -3e+38
    %v412 = vsel %vm400, %v281, -3e+38
    %v413 = vsel %vm401, %v286, -3e+38
    %v414 = vsel %vm402, %v291, -3e+38
    %v415 = vsel %vm399, %v296, -3e+38
    %v416 = vsel %vm400, %v301, -3e+38
    %v417 = vsel %vm401, %v306, -3e+38
    %v418 = vsel %vm402, %v311, -3e+38
    %v419 = vsel %vm399, %v316, -3e+38
    %v420 = vsel %vm400, %v321, -3e+38
    %v421 = vsel %vm401, %v326, -3e+38
    %v422 = vsel %vm402, %v331, -3e+38
    %v423 = vsel %vm399, %v336, -3e+38
    %v424 = vsel %vm400, %v341, -3e+38
    %v425 = vsel %vm401, %v346, -3e+38
    %v426 = vsel %vm402, %v351, -3e+38
    %v427 = vsel %vm399, %v356, -3e+38
    %v428 = vsel %vm400, %v361, -3e+38
    %v429 = vsel %vm401, %v366, -3e+38
    %v430 = vsel %vm402, %v371, -3e+38
    %v431 = vsel %vm399, %v376, -3e+38
    %v432 = vsel %vm400, %v381, -3e+38
    %v433 = vsel %vm401, %v386, -3e+38
    %v434 = vsel %vm402, %v391, -3e+38
    %vm435 = vcmask 261120
    %v436 = vsel %vm435, %v403, -inf
    %v437 = vsel %vm435, %v404, -inf
    %v438 = vmax.f32 %v436, %v437
    %v439 = vsel %vm435, %v405, -inf
    %v440 = vmax.f32 %v438, %v439
    %v441 = vsel %vm435, %v406, -inf
    %v442 = vmax.f32 %v440, %v441
    %v443 = vrot.slane %v442, 4
    %v444 = vmax.f32 %v442, %v443
    %v445 = vrot.slane %v444, 2
    %v446 = vmax.f32 %v444, %v445
    %v447 = vrot.slane %v446, 1
    %v448 = vmax.f32 %v446, %v447
    %v449 = vsel %vm435, %v407, -inf
    %v450 = vsel %vm435, %v408, -inf
    %v451 = vmax.f32 %v449, %v450
    %v452 = vsel %vm435, %v409, -inf
    %v453 = vmax.f32 %v451, %v452
    %v454 = vsel %vm435, %v410, -inf
    %v455 = vmax.f32 %v453, %v454
    %v456 = vrot.slane %v455, 4
    %v457 = vmax.f32 %v455, %v456
    %v458 = vrot.slane %v457, 2
    %v459 = vmax.f32 %v457, %v458
    %v460 = vrot.slane %v459, 1
    %v461 = vmax.f32 %v459, %v460
    %v462 = vsel %vm435, %v411, -inf
    %v463 = vsel %vm435, %v412, -inf
    %v464 = vmax.f32 %v462, %v463
    %v465 = vsel %vm435, %v413, -inf
    %v466 = vmax.f32 %v464, %v465
    %v467 = vsel %vm435, %v414, -inf
    %v468 = vmax.f32 %v466, %v467
    %v469 = vrot.slane %v468, 4
    %v470 = vmax.f32 %v468, %v469
    %v471 = vrot.slane %v470, 2
    %v472 = vmax.f32 %v470, %v471
    %v473 = vrot.slane %v472, 1
    %v474 = vmax.f32 %v472, %v473
    %v475 = vsel %vm435, %v415, -inf
    %v476 = vsel %vm435, %v416, -inf
    %v477 = vmax.f32 %v475, %v476
    %v478 = vsel %vm435, %v417, -inf
    %v479 = vmax.f32 %v477, %v478
    %v480 = vsel %vm435, %v418, -inf
    %v481 = vmax.f32 %v479, %v480
    %v482 = vrot.slane %v481, 4
    %v483 = vmax.f32 %v481, %v482
    %v484 = vrot.slane %v483, 2
    %v485 = vmax.f32 %v483, %v484
    %v486 = vrot.slane %v485, 1
    %v487 = vmax.f32 %v485, %v486
    %v488 = vsel %vm435, %v419, -inf
    %v489 = vsel %vm435, %v420, -inf
    %v490 = vmax.f32 %v488, %v489
    %v491 = vsel %vm435, %v421, -inf
    %v492 = vmax.f32 %v490, %v491
    %v493 = vsel %vm435, %v422, -inf
    %v494 = vmax.f32 %v492, %v493
    %v495 = vrot.slane %v494, 4
    %v496 = vmax.f32 %v494, %v495
    %v497 = vrot.slane %v496, 2
    %v498 = vmax.f32 %v496, %v497
    %v499 = vrot.slane %v498, 1
    %v500 = vmax.f32 %v498, %v499
    %v501 = vsel %vm435, %v423, -inf
    %v502 = vsel %vm435, %v424, -inf
    %v503 = vmax.f32 %v501, %v502
    %v504 = vsel %vm435, %v425, -inf
    %v505 = vmax.f32 %v503, %v504
    %v506 = vsel %vm435, %v426, -inf
    %v507 = vmax.f32 %v505, %v506
    %v508 = vrot.slane %v507, 4
    %v509 = vmax.f32 %v507, %v508
    %v510 = vrot.slane %v509, 2
    %v511 = vmax.f32 %v509, %v510
    %v512 = vrot.slane %v511, 1
    %v513 = vmax.f32 %v511, %v512
    %v514 = vsel %vm435, %v427, -inf
    %v515 = vsel %vm435, %v428, -inf
    %v516 = vmax.f32 %v514, %v515
    %v517 = vsel %vm435, %v429, -inf
    %v518 = vmax.f32 %v516, %v517
    %v519 = vsel %vm435, %v430, -inf
    %v520 = vmax.f32 %v518, %v519
    %v521 = vrot.slane %v520, 4
    %v522 = vmax.f32 %v520, %v521
    %v523 = vrot.slane %v522, 2
    %v524 = vmax.f32 %v522, %v523
    %v525 = vrot.slane %v524, 1
    %v526 = vmax.f32 %v524, %v525
    %v527 = vsel %vm435, %v431, -inf
    %v528 = vsel %vm435, %v432, -inf
    %v529 = vmax.f32 %v527, %v528
    %v530 = vsel %vm435, %v433, -inf
    %v531 = vmax.f32 %v529, %v530
    %v532 = vsel %vm435, %v434, -inf
    %v533 = vmax.f32 %v531, %v532
    %v534 = vrot.slane %v533, 4
    %v535 = vmax.f32 %v533, %v534
    %v536 = vrot.slane %v535, 2
    %v537 = vmax.f32 %v535, %v536
    %v538 = vrot.slane %v537, 1
    %v539 = vmax.f32 %v537, %v538
    %v540 = vld [vmem:[%s3] sm:$0x1]
    %v542 = vlaneseq
    %v543 = vshrl.u32 %v542, 7
    %v544 = vsub.s32 0, %v543
    %v545 = vrot.slane %v540, %v544
    %v547 = vadd.f32 %v448, %v545
    %v548 = vadd.f32 %v461, %v545
    %v549 = vadd.f32 %v474, %v545
    %v550 = vadd.f32 %v487, %v545
    %v551 = vadd.f32 %v500, %v545
    %v552 = vadd.f32 %v513, %v545
    %v553 = vadd.f32 %v526, %v545
    %v554 = vadd.f32 %v539, %v545
    %v555 = vmax.f32 %v547, 0.0
    %v556 = vmax.f32 %v548, 0.0
    %v557 = vmax.f32 %v549, 0.0
    %v558 = vmax.f32 %v550, 0.0
    %v559 = vmax.f32 %v551, 0.0
    %v560 = vmax.f32 %v552, 0.0
    %v561 = vmax.f32 %v553, 0.0
    %v562 = vmax.f32 %v554, 0.0
    %v563 = vld [vmem:[%s1] sm:$0xff]
    %v564 = vld [vmem:[%s4] sm:$0xff]
    %v565 = vld [vmem:[%s4 + $0x8] sm:$0xff]
    %v566 = vld [vmem:[%s5] sm:$0xff]
    %v567 = vld [vmem:[%s5 + $0x8] sm:$0xff]
    %v568 = vld [vmem:[%s5 + $0x10] sm:$0xff]
    %v569 = vld [vmem:[%s5 + $0x18] sm:$0xff]
    %v578 = vrot.slane %v556, 7
    %vm579 = vcmask 1041409
    %v580 = vsel %vm579, %v578, %v555
    %v581 = vrot.slane %v557, 6
    %vm582 = vcmask 1042434
    %v583 = vsel %vm582, %v581, %v580
    %v584 = vrot.slane %v558, 5
    %vm585 = vcmask 1043459
    %v586 = vsel %vm585, %v584, %v583
    %v587 = vrot.slane %v559, 4
    %vm588 = vcmask 1044484
    %v589 = vsel %vm588, %v587, %v586
    %v590 = vrot.slane %v560, 3
    %vm591 = vcmask 1045509
    %v592 = vsel %vm591, %v590, %v589
    %v593 = vrot.slane %v561, 2
    %vm594 = vcmask 1046534
    %v595 = vsel %vm594, %v593, %v592
    %v596 = vrot.slane %v562, 1
    %vm597 = vcmask 1047559
    %v598 = vsel %vm597, %v596, %v595
    %v599 = vsel %vm435, %v598, 0
    %601 = vmatprep.subr.mxu0 0.0
    %602 = vmatpush1.msra.mxu0 0.0
    %603 = vmatprep.subr.mxu0 0.0
    %604 = vmatpush1.msra.mxu0 0.0
    %605 = vmatprep.subr.mxu0 0.0
    %606 = vmatpush1.msra.mxu0 0.0
    %607 = vmatprep.subr.mxu0 0.0
    %608 = vmatpush1.msra.mxu0 0.0
    %609 = vmatprep.subr.mxu0 0.0
    %610 = vmatpush1.msra.mxu0 0.0
    %611 = vmatprep.subr.mxu0 0.0
    %612 = vmatpush1.msra.mxu0 0.0
    %613 = vmatprep.subr.mxu0 0.0
    %614 = vmatpush1.msra.mxu0 0.0
    %615 = vmatprep.subr.mxu0 0.0
    %616 = vmatpush1.msra.mxu0 0.0
    %617 = vmatprep.subr.mxu0 0.0
    %618 = vmatpush1.msra.mxu0 0.0
    %619 = vmatprep.subr.mxu0 0.0
    %620 = vmatpush1.msra.mxu0 0.0
    %621 = vmatprep.subr.mxu0 0.0
    %622 = vmatpush1.msra.mxu0 0.0
    %623 = vmatprep.subr.mxu0 0.0
    %624 = vmatpush1.msra.mxu0 0.0
    %625 = vmatprep.subr.mxu0 0.0
    %626 = vmatpush1.msra.mxu0 %v569
    %627 = vmatprep.subr.mxu0 0.0
    %628 = vmatpush1.msra.mxu0 %v568
    %629 = vmatprep.subr.mxu0 0.0
    %630 = vmatpush1.msra.mxu0 %v567
    %631 = vmatprep.subr.mxu0 0.0
    %632 = vmatpush1.msra.mxu0 %v566
    %633 = vmatprep.subr.mxu0 0.0
    %634 = vmatpush2.msra.mxu0 0.0
    %635 = vmatprep.subr.mxu0 0.0
    %636 = vmatpush2.msra.mxu0 0.0
    %637 = vmatprep.subr.mxu0 0.0
    %638 = vmatpush2.msra.mxu0 0.0
    %639 = vmatprep.subr.mxu0 0.0
    %640 = vmatpush2.msra.mxu0 0.0
    %641 = vmatprep.subr.mxu0 0.0
    %642 = vmatpush2.msra.mxu0 0.0
    %643 = vmatprep.subr.mxu0 0.0
    %644 = vmatpush2.msra.mxu0 0.0
    %645 = vmatprep.subr.mxu0 0.0
    %646 = vmatpush2.msra.mxu0 0.0
    %647 = vmatprep.subr.mxu0 0.0
    %648 = vmatpush2.msra.mxu0 0.0
    %649 = vmatprep.subr.mxu0 0.0
    %650 = vmatpush2.msra.mxu0 0.0
    %651 = vmatprep.subr.mxu0 0.0
    %652 = vmatpush2.msra.mxu0 0.0
    %653 = vmatprep.subr.mxu0 0.0
    %654 = vmatpush2.msra.mxu0 0.0
    %655 = vmatprep.subr.mxu0 0.0
    %656 = vmatpush2.msra.mxu0 0.0
    %657 = vmatprep.subr.mxu0 0.0
    %658 = vmatpush2.msra.mxu0 0.0
    %659 = vmatprep.subr.mxu0 0.0
    %660 = vmatpush2.msra.mxu0 0.0
    %661 = vmatprep.subr.mxu0 0.0
    %662 = vmatpush2.msra.mxu0 0.0
    %663 = vmatprep.subr.mxu0 0.0
    %664 = vmatpush2.msra.mxu0 0.0
    %665 = vmatprep.mubr.f32.mxu0 0.0
    %666 = vmatmul.mubr.f32.gmra.mxu0 %v599
    %v667 = vpop.f32.mrf.mxu0
    %v668 = vadd.f32 0.0, %v667
    %v669 = vpop.f32.mrf.mxu0
    %670 = vdwg.mxu0
    %vm671 = vcmask 130048
    %v673 = vsel %vm671, %v563, 0
    %675 = vmatprep.subr.mxu0 0.0
    %676 = vmatpush1.msra.mxu0 0.0
    %677 = vmatprep.subr.mxu0 0.0
    %678 = vmatpush1.msra.mxu0 0.0
    %679 = vmatprep.subr.mxu0 0.0
    %680 = vmatpush1.msra.mxu0 0.0
    %681 = vmatprep.subr.mxu0 0.0
    %682 = vmatpush1.msra.mxu0 0.0
    %683 = vmatprep.subr.mxu0 0.0
    %684 = vmatpush1.msra.mxu0 0.0
    %685 = vmatprep.subr.mxu0 0.0
    %686 = vmatpush1.msra.mxu0 0.0
    %687 = vmatprep.subr.mxu0 0.0
    %688 = vmatpush1.msra.mxu0 0.0
    %689 = vmatprep.subr.mxu0 0.0
    %690 = vmatpush1.msra.mxu0 0.0
    %691 = vmatprep.subr.mxu0 0.0
    %692 = vmatpush1.msra.mxu0 0.0
    %693 = vmatprep.subr.mxu0 0.0
    %694 = vmatpush1.msra.mxu0 0.0
    %695 = vmatprep.subr.mxu0 0.0
    %696 = vmatpush1.msra.mxu0 0.0
    %697 = vmatprep.subr.mxu0 0.0
    %698 = vmatpush1.msra.mxu0 0.0
    %699 = vmatprep.subr.mxu0 0.0
    %700 = vmatpush1.msra.mxu0 0.0
    %701 = vmatprep.subr.mxu0 0.0
    %702 = vmatpush1.msra.mxu0 0.0
    %703 = vmatprep.subr.mxu0 0.0
    %704 = vmatpush1.msra.mxu0 %v565
    %705 = vmatprep.subr.mxu0 0.0
    %706 = vmatpush1.msra.mxu0 %v564
    %707 = vmatprep.subr.mxu0 0.0
    %708 = vmatpush2.msra.mxu0 0.0
    %709 = vmatprep.subr.mxu0 0.0
    %710 = vmatpush2.msra.mxu0 0.0
    %711 = vmatprep.subr.mxu0 0.0
    %712 = vmatpush2.msra.mxu0 0.0
    %713 = vmatprep.subr.mxu0 0.0
    %714 = vmatpush2.msra.mxu0 0.0
    %715 = vmatprep.subr.mxu0 0.0
    %716 = vmatpush2.msra.mxu0 0.0
    %717 = vmatprep.subr.mxu0 0.0
    %718 = vmatpush2.msra.mxu0 0.0
    %719 = vmatprep.subr.mxu0 0.0
    %720 = vmatpush2.msra.mxu0 0.0
    %721 = vmatprep.subr.mxu0 0.0
    %722 = vmatpush2.msra.mxu0 0.0
    %723 = vmatprep.subr.mxu0 0.0
    %724 = vmatpush2.msra.mxu0 0.0
    %725 = vmatprep.subr.mxu0 0.0
    %726 = vmatpush2.msra.mxu0 0.0
    %727 = vmatprep.subr.mxu0 0.0
    %728 = vmatpush2.msra.mxu0 0.0
    %729 = vmatprep.subr.mxu0 0.0
    %730 = vmatpush2.msra.mxu0 0.0
    %731 = vmatprep.subr.mxu0 0.0
    %732 = vmatpush2.msra.mxu0 0.0
    %733 = vmatprep.subr.mxu0 0.0
    %734 = vmatpush2.msra.mxu0 0.0
    %735 = vmatprep.subr.mxu0 0.0
    %736 = vmatpush2.msra.mxu0 0.0
    %737 = vmatprep.subr.mxu0 0.0
    %738 = vmatpush2.msra.mxu0 0.0
    %739 = vmatprep.mubr.f32.mxu0 0.0
    %740 = vmatmul.mubr.f32.gmra.mxu0 %v673
    %v741 = vpop.f32.mrf.mxu0
    %v742 = vadd.f32 %v668, %v741
    %v743 = vpop.f32.mrf.mxu0
    %744 = vdwg.mxu0
    %v745 = vld [vmem:[%s6] sm:$0x1]
    %v747 = vlaneseq
    %v748 = vshrl.u32 %v747, 7
    %v749 = vsub.s32 0, %v748
    %v750 = vrot.slane %v745, %v749
    %v752 = vadd.f32 %v742, %v750
    %v753 = vmax.f32 %v752, 0.0
    %v754 = vld [vmem:[%s7] sm:$0xff]
    %v755 = vld [vmem:[%s7 + $0x8] sm:$0xff]
    %v756 = vld [vmem:[%s7 + $0x10] sm:$0xff]
    %v757 = vld [vmem:[%s7 + $0x18] sm:$0xff]
    %v758 = vld [vmem:[%s7 + $0x20] sm:$0xff]
    %v759 = vld [vmem:[%s7 + $0x28] sm:$0xff]
    %v760 = vld [vmem:[%s7 + $0x30] sm:$0xff]
    %v761 = vld [vmem:[%s7 + $0x38] sm:$0xff]
    %v762 = vld [vmem:[%s7 + $0x40] sm:$0xff]
    %v763 = vld [vmem:[%s7 + $0x48] sm:$0xff]
    %v764 = vld [vmem:[%s7 + $0x50] sm:$0xff]
    %v765 = vld [vmem:[%s7 + $0x58] sm:$0xff]
    %v766 = vld [vmem:[%s7 + $0x60] sm:$0xff]
    %v767 = vld [vmem:[%s7 + $0x68] sm:$0xff]
    %v768 = vld [vmem:[%s7 + $0x70] sm:$0xff]
    %v769 = vld [vmem:[%s7 + $0x78] sm:$0xff]
    %v770 = vld [vmem:[%s8] sm:$0x1]
    %v772 = vlaneseq
    %v773 = vshrl.u32 %v772, 7
    %v774 = vsub.s32 0, %v773
    %v775 = vrot.slane %v770, %v774
    %777 = vmatprep.subr.mxu0 0.0
    %778 = vmatpush1.msra.mxu0 %v769
    %779 = vmatprep.subr.mxu0 0.0
    %780 = vmatpush1.msra.mxu0 %v768
    %781 = vmatprep.subr.mxu0 0.0
    %782 = vmatpush1.msra.mxu0 %v767
    %783 = vmatprep.subr.mxu0 0.0
    %784 = vmatpush1.msra.mxu0 %v766
    %785 = vmatprep.subr.mxu0 0.0
    %786 = vmatpush1.msra.mxu0 %v765
    %787 = vmatprep.subr.mxu0 0.0
    %788 = vmatpush1.msra.mxu0 %v764
    %789 = vmatprep.subr.mxu0 0.0
    %790 = vmatpush1.msra.mxu0 %v763
    %791 = vmatprep.subr.mxu0 0.0
    %792 = vmatpush1.msra.mxu0 %v762
    %793 = vmatprep.subr.mxu0 0.0
    %794 = vmatpush1.msra.mxu0 %v761
    %795 = vmatprep.subr.mxu0 0.0
    %796 = vmatpush1.msra.mxu0 %v760
    %797 = vmatprep.subr.mxu0 0.0
    %798 = vmatpush1.msra.mxu0 %v759
    %799 = vmatprep.subr.mxu0 0.0
    %800 = vmatpush1.msra.mxu0 %v758
    %801 = vmatprep.subr.mxu0 0.0
    %802 = vmatpush1.msra.mxu0 %v757
    %803 = vmatprep.subr.mxu0 0.0
    %804 = vmatpush1.msra.mxu0 %v756
    %805 = vmatprep.subr.mxu0 0.0
    %806 = vmatpush1.msra.mxu0 %v755
    %807 = vmatprep.subr.mxu0 0.0
    %808 = vmatpush1.msra.mxu0 %v754
    %809 = vmatprep.subr.mxu0 0.0
    %810 = vmatpush2.msra.mxu0 0.0
    %811 = vmatprep.subr.mxu0 0.0
    %812 = vmatpush2.msra.mxu0 0.0
    %813 = vmatprep.subr.mxu0 0.0
    %814 = vmatpush2.msra.mxu0 0.0
    %815 = vmatprep.subr.mxu0 0.0
    %816 = vmatpush2.msra.mxu0 0.0
    %817 = vmatprep.subr.mxu0 0.0
    %818 = vmatpush2.msra.mxu0 0.0
    %819 = vmatprep.subr.mxu0 0.0
    %820 = vmatpush2.msra.mxu0 0.0
    %821 = vmatprep.subr.mxu0 0.0
    %822 = vmatpush2.msra.mxu0 0.0
    %823 = vmatprep.subr.mxu0 0.0
    %824 = vmatpush2.msra.mxu0 0.0
    %825 = vmatprep.subr.mxu0 0.0
    %826 = vmatpush2.msra.mxu0 0.0
    %827 = vmatprep.subr.mxu0 0.0
    %828 = vmatpush2.msra.mxu0 0.0
    %829 = vmatprep.subr.mxu0 0.0
    %830 = vmatpush2.msra.mxu0 0.0
    %831 = vmatprep.subr.mxu0 0.0
    %832 = vmatpush2.msra.mxu0 0.0
    %833 = vmatprep.subr.mxu0 0.0
    %834 = vmatpush2.msra.mxu0 0.0
    %835 = vmatprep.subr.mxu0 0.0
    %836 = vmatpush2.msra.mxu0 0.0
    %837 = vmatprep.subr.mxu0 0.0
    %838 = vmatpush2.msra.mxu0 0.0
    %839 = vmatprep.subr.mxu0 0.0
    %840 = vmatpush2.msra.mxu0 0.0
    %841 = vmatprep.mubr.f32.mxu0 0.0
    %842 = vmatmul.mubr.f32.gmra.mxu0 %v753
    %v843 = vpop.f32.mrf.mxu0
    %v844 = vadd.f32 %v775, %v843
    %v845 = vpop.f32.mrf.mxu0
    %846 = vdwg.mxu0
    %847 = vst [vmem:[#allocation2] sm:$0xff] %v844
    // Predicated region
    $region38: #{tpu_custom_call.1} parent=1 // pred_check
      _
    $region39: #{tpu_custom_call.1} parent=1 // pred_check_branch
      %849 = sbr.rel (0) target = $region41
    $region40: #{tpu_custom_call.1} parent=1 // pred_region
      %s851 = ssub.s32 128, 128
      %852 = vsyncadd [#allocation3], %s851
      %s854 = sshll.u32 [#allocation2], 4
      %s855 = int_to_ptr.vmem [resolvable:$true] %s854
      %857 = dma.vmem_to_hbm [thread:$0]  %s855, 128, %s9, [#allocation3]
    $region41: #{tpu_custom_call.1} parent=1 // pred_fallthru
      _
    // Predicated region
    $region42: #{tpu_custom_call.1} parent=1 // pred_check
      _
    $region43: #{tpu_custom_call.1} parent=1 // pred_check_branch
      %859 = sbr.rel (0) target = $region45
    $region44: #{tpu_custom_call.1} parent=1 // pred_region
      %860 = dma.done [#allocation3], 128
    $region45: #{tpu_custom_call.1} parent=1 // pred_fallthru
      _
    %861 = vsyncpa [#allocation3], 1

</llo_original>
